<compile_context>
chip_gen: v7x
topology: tpu7x:2x2x1
jax: 0.10.0
libtpu: 0.0.40
codegen_flags: <defaults>
</compile_context>

<pallas_src>
import jax
import jax.numpy as jnp
from jax import lax
from jax.experimental import pallas as pl
from jax.experimental.pallas import tpu as pltpu

EPS = 1e-5


def _round_up(x, m):
    return -(-x // m) * m


# ---------------------------------------------------------------------------
# Fused Pallas kernel: whole network = n_layers matmuls on VMEM-resident data
# ---------------------------------------------------------------------------
def make_fused_kernel(cdims, odims):
    """cdims[i] = Cin_i*Lin_i (contraction dim), odims[i] = Cout_i*Lout_i (output dim)."""
    n_layers = len(cdims)

    def kernel(x_ref, w_ref, b_ref, o_ref):
        # Lane-dense activation layout: (N, C*L), batch on sublanes.
        act = x_ref[...].astype(jnp.float32)
        for i in range(n_layers):
            c, o = cdims[i], odims[i]
            w = w_ref[i, :c, :o]          # banded (Toeplitz) weight, static slice load
            b = b_ref[i, :, :o]           # (1, o) folded shift (conv bias + BN + input BN)
            y = jnp.dot(act, w, preferred_element_type=jnp.float32) + b
            if i < n_layers - 1:
                y = jnp.maximum(y, 0.0)   # ReLU on hidden layers only
            act = y
        o_ref[...] = act.astype(o_ref.dtype)   # single lane-dense store

    return kernel


# ---------------------------------------------------------------------------
# Wrapper (jit-able closure over the static config)
# ---------------------------------------------------------------------------
def build_forward(hp, folded):
    cdims, odims = folded['cdims'], folded['odims']
    cout_last = hp['out_features']
    l_out = odims[-1] // cout_last
    kernel = make_fused_kernel(cdims, odims)
    vmem = pl.BlockSpec(memory_space=pltpu.MemorySpace.VMEM)

    def fwd(x, w_stack, b_stack):
        n, cin, l = x.shape
        assert cin * l == cdims[0]
        # Pre-flatten the input in XLA (free reshape of a contiguous array):
        # lane-dense (N, Cin*L) instead of an in-kernel concat.
        x_flat = x.reshape(n, cin * l).astype(jnp.float32)
        out_flat = pl.pallas_call(
            kernel,
            out_shape=jax.ShapeDtypeStruct((n, odims[-1]), jnp.float32),
            in_specs=[vmem, vmem, vmem],
            out_specs=vmem,
        )(x_flat, w_stack, b_stack)
        # Un-flatten outside the kernel (pure layout plumbing).
        return out_flat.reshape(n, cout_last, l_out)

    return jax.jit(fwd)


# ---------------------------------------------------------------------------
# Parameters: raw init (PyTorch-like) + one-time folding into kernel layout
# ---------------------------------------------------------------------------
def init_params(key, hp):
    channels = [hp['in_features']] + list(hp['channels']) + [hp['out_features']]
    n = len(hp['strides'])
    keys = jax.random.split(key, 4 + 2 * n + 4 * (n - 1))
    ki = 0

    def nk():
        nonlocal ki
        k = keys[ki]
        ki += 1
        return k

    def bn_params(c):
        return {
            'gamma': jax.random.uniform(nk(), (c,), minval=0.5, maxval=1.5),
            'beta': jax.random.normal(nk(), (c,)) * 0.1,
            'mean': jax.random.normal(nk(), (c,)) * 0.1,
            'var': jnp.abs(jax.random.normal(nk(), (c,))) * 0.1 + 0.9,
        }

    params = {'in_bn': bn_params(hp['in_features']), 'convs': [], 'bns': []}
    for i in range(n):
        cin, cout, K = channels[i], channels[i + 1], hp['kernel_lenghts'][i]
        w = jax.random.normal(nk(), (cout, cin, K)) / jnp.sqrt(cin * K)
        b = jax.random.normal(nk(), (cout,)) * 0.05
        params['convs'].append({'w': w.astype(jnp.float32), 'b': b.astype(jnp.float32)})
        if i < n - 1 and hp['use_batch_normalization']:
            params['bns'].append(bn_params(cout))
    return params


def _banded_weight(w, pad, l_in):
    """w: (Cout, Cin, K) stride-1 conv -> banded (Cin*Lin, Cout*Lout) weight.
    Zero padding is absorbed: out-of-range taps are simply omitted."""
    cout, cin, K = w.shape
    l_out = l_in + 2 * pad - K + 1
    li = jnp.arange(l_in)[:, None]          # (Lin, 1)
    lo = jnp.arange(l_out)[None, :]         # (1, Lout)
    k = li - lo + pad                       # tap index, (Lin, Lout)
    valid = (k >= 0) & (k < K)
    kc = jnp.clip(k, 0, K - 1)
    band = jnp.take(w, kc, axis=2)          # (Cout, Cin, Lin, Lout)
    band = jnp.where(valid[None, None], band, 0.0)
    band = jnp.transpose(band, (1, 2, 0, 3)).reshape(cin * l_in, cout * l_out)
    return band, l_out


def fold_params(params, hp, L):
    """One-time prep (outside the hot path): fold pad/taps into banded weights,
    fold eval-mode BN + conv bias + input BN, stack everything into 2 slabs."""
    n = len(hp['strides'])

    in_bn = params['in_bn']
    s_in = in_bn['gamma'] / jnp.sqrt(in_bn['var'] + EPS)
    b_in = in_bn['beta'] - in_bn['mean'] * s_in

    ws, bs, cdims, odims = [], [], [], []
    l_cur = L
    for i in range(n):
        assert hp['strides'][i] == 1, "TODO(synk): only stride-1 convolutions implemented"
        w = params['convs'][i]['w'].astype(jnp.float32)    # (Cout, Cin, K)
        cb = params['convs'][i]['b'].astype(jnp.float32)   # (Cout,)
        cout, cin, _ = w.shape
        pad = hp['paddings'][i]

        band, l_out = _banded_weight(w, pad, l_cur)        # (Cin*Lcur, Cout*Lout)

        if i < n - 1 and hp['use_batch_normalization']:
            bn = params['bns'][i]
            s = bn['gamma'] / jnp.sqrt(bn['var'] + EPS)
            shift_c = cb * s + (bn['beta'] - bn['mean'] * s)
        else:
            s = jnp.ones((cout,), jnp.float32)
            shift_c = cb
        band = band * jnp.repeat(s, l_out)[None, :]        # fold BN scale into columns
        shift = jnp.repeat(shift_c, l_out)                 # (Cout*Lout,)

        if i == 0:
            # Fold input BatchNorm1d (applied before padding) into layer 0.
            b_in_vec = jnp.repeat(b_in, l_cur)             # (Cin*Lin,)
            shift = shift + b_in_vec @ band
            band = band * jnp.repeat(s_in, l_cur)[:, None]

        ws.append(band)
        bs.append(shift)
        cdims.append(cin * l_cur)
        odims.append(cout * l_out)
        l_cur = l_out

    max_c = _round_up(max(cdims), 8)
    max_o = _round_up(max(odims), 128)
    w_stack = jnp.zeros((n, max_c, max_o), jnp.float32)
    b_stack = jnp.zeros((n, 1, max_o), jnp.float32)
    for i in range(n):
        w_stack = w_stack.at[i, :cdims[i], :odims[i]].set(ws[i])
        b_stack = b_stack.at[i, 0, :odims[i]].set(bs[i])

    return {'w': w_stack, 'b': b_stack, 'cdims': tuple(cdims), 'odims': tuple(odims)}


# ---------------------------------------------------------------------------
# Pure-JAX reference (lax.conv, unfolded params) for correctness checking
# ---------------------------------------------------------------------------
def ref_forward(params, x, hp):
    p = params['in_bn']
    s = p['gamma'] / jnp.sqrt(p['var'] + EPS)
    x = x * s[None, :, None] + (p['beta'] - p['mean'] * s)[None, :, None]
    n = len(hp['strides'])
    for i in range(n):
        lp = params['convs'][i]
        x = lax.conv_general_dilated(
            x, lp['w'], (hp['strides'][i],),
            [(hp['paddings'][i], hp['paddings'][i])],
            dimension_numbers=('NCH', 'OIH', 'NCH'))
        x = x + lp['b'][None, :, None]
        if i < n - 1:
            if hp['use_batch_normalization']:
                bn = params['bns'][i]
                s2 = bn['gamma'] / jnp.sqrt(bn['var'] + EPS)
                x = x * s2[None, :, None] + (bn['beta'] - bn['mean'] * s2)[None, :, None]
            x = jnp.maximum(x, 0.0)
    return x


if __name__ == "__main__":
    hp = {
        'in_features': 4,
        'out_features': 8,
        'channels': [16, 16],          # hidden channels -> full: [4, 16, 16, 8]
        'strides': [1, 1, 1],
        'kernel_lenghts': [3, 3, 3],
        'paddings': [1, 1, 1],
        'use_dropout': False,
        'dropout': [0.0, 0.0, 0.0],
        'use_batch_normalization': True,
        'activation_function': 'relu',
    }

    key = jax.random.PRNGKey(0)
    pkey, xkey = jax.random.split(key)
    params = init_params(pkey, hp)
    x = jax.random.normal(xkey, (2, hp['in_features'], 16), dtype=jnp.float32)

    folded = fold_params(params, hp, L=x.shape[-1])   # one-time folding, outside hot path
    fwd = build_forward(hp, folded)

    out = jax.block_until_ready(fwd(x, folded['w'], folded['b']))

    ref = ref_forward(params, x, hp)
    assert out.shape == (2, hp['out_features'], 16), out.shape
    assert jnp.allclose(out, ref, atol=1e-4, rtol=1e-4), float(jnp.max(jnp.abs(out - ref)))

    print("KERNEL_OK")
</pallas_src>

<mosaic_0001>
module attributes {stable_mosaic.version = 11 : i64} {
  func.func @kernel(%arg0: memref<2x64xf32, #tpu.memory_space<vmem>>, %arg1: memref<3x256x256xf32, #tpu.memory_space<vmem>>, %arg2: memref<3x1x256xf32, #tpu.memory_space<vmem>>, %arg3: memref<2x128xf32, #tpu.memory_space<vmem>>) attributes {dimension_semantics = [], scalar_prefetch = 0 : i64, scratch_operands = 0 : i64, tpu.core_type = #tpu.core_type<tc>} {
    %c0 = arith.constant 0 : index
    %c0_0 = arith.constant 0 : index
    %0 = vector.load %arg0[%c0, %c0_0] : memref<2x64xf32, #tpu.memory_space<vmem>>, vector<2x64xf32>
    %c0_1 = arith.constant 0 : index
    %c0_2 = arith.constant 0 : index
    %c0_3 = arith.constant 0 : index
    %1 = vector.load %arg1[%c0_1, %c0_2, %c0_3] : memref<3x256x256xf32, #tpu.memory_space<vmem>>, vector<1x64x256xf32>
    %2 = vector.shape_cast %1 : vector<1x64x256xf32> to vector<64x256xf32>
    %c0_4 = arith.constant 0 : index
    %c0_5 = arith.constant 0 : index
    %c0_6 = arith.constant 0 : index
    %3 = vector.load %arg2[%c0_4, %c0_5, %c0_6] : memref<3x1x256xf32, #tpu.memory_space<vmem>>, vector<1x1x256xf32>
    %4 = vector.shape_cast %3 : vector<1x1x256xf32> to vector<1x256xf32>
    %cst = arith.constant dense<0.000000e+00> : vector<2x256xf32>
    %5 = tpu.matmul %0, %2, %cst {dimension_numbers = #tpu.dot_dimension_numbers<[1], [0], [0], [1], [0, 0, 1, 1], [], []>} : vector<2x64xf32>, vector<64x256xf32>, vector<2x256xf32> -> vector<2x256xf32>
    %6 = vector.broadcast %4 : vector<1x256xf32> to vector<2x256xf32>
    %7 = arith.addf %5, %6 : vector<2x256xf32>
    %cst_7 = arith.constant 0.000000e+00 : f32
    %8 = vector.broadcast %cst_7 : f32 to vector<2x256xf32>
    %9 = arith.maximumf %7, %8 : vector<2x256xf32>
    %c1 = arith.constant 1 : index
    %c0_8 = arith.constant 0 : index
    %c0_9 = arith.constant 0 : index
    %10 = vector.load %arg1[%c1, %c0_8, %c0_9] : memref<3x256x256xf32, #tpu.memory_space<vmem>>, vector<1x256x256xf32>
    %11 = vector.shape_cast %10 : vector<1x256x256xf32> to vector<256x256xf32>
    %c1_10 = arith.constant 1 : index
    %c0_11 = arith.constant 0 : index
    %c0_12 = arith.constant 0 : index
    %12 = vector.load %arg2[%c1_10, %c0_11, %c0_12] : memref<3x1x256xf32, #tpu.memory_space<vmem>>, vector<1x1x256xf32>
    %13 = vector.shape_cast %12 : vector<1x1x256xf32> to vector<1x256xf32>
    %cst_13 = arith.constant dense<0.000000e+00> : vector<2x256xf32>
    %14 = tpu.matmul %9, %11, %cst_13 {dimension_numbers = #tpu.dot_dimension_numbers<[1], [0], [0], [1], [0, 0, 1, 1], [], []>} : vector<2x256xf32>, vector<256x256xf32>, vector<2x256xf32> -> vector<2x256xf32>
    %15 = vector.broadcast %13 : vector<1x256xf32> to vector<2x256xf32>
    %16 = arith.addf %14, %15 : vector<2x256xf32>
    %cst_14 = arith.constant 0.000000e+00 : f32
    %17 = vector.broadcast %cst_14 : f32 to vector<2x256xf32>
    %18 = arith.maximumf %16, %17 : vector<2x256xf32>
    %c2 = arith.constant 2 : index
    %c0_15 = arith.constant 0 : index
    %c0_16 = arith.constant 0 : index
    %19 = vector.load %arg1[%c2, %c0_15, %c0_16] : memref<3x256x256xf32, #tpu.memory_space<vmem>>, vector<1x256x128xf32>
    %20 = vector.shape_cast %19 : vector<1x256x128xf32> to vector<256x128xf32>
    %c2_17 = arith.constant 2 : index
    %c0_18 = arith.constant 0 : index
    %c0_19 = arith.constant 0 : index
    %21 = vector.load %arg2[%c2_17, %c0_18, %c0_19] : memref<3x1x256xf32, #tpu.memory_space<vmem>>, vector<1x1x128xf32>
    %22 = vector.shape_cast %21 : vector<1x1x128xf32> to vector<1x128xf32>
    %cst_20 = arith.constant dense<0.000000e+00> : vector<2x128xf32>
    %23 = tpu.matmul %18, %20, %cst_20 {dimension_numbers = #tpu.dot_dimension_numbers<[1], [0], [0], [1], [0, 0, 1, 1], [], []>} : vector<2x256xf32>, vector<256x128xf32>, vector<2x128xf32> -> vector<2x128xf32>
    %24 = vector.broadcast %22 : vector<1x128xf32> to vector<2x128xf32>
    %25 = arith.addf %23, %24 : vector<2x128xf32>
    %c0_21 = arith.constant 0 : index
    %c0_22 = arith.constant 0 : index
    %26 = vector.load %arg3[%c0_21, %c0_22] : memref<2x128xf32, #tpu.memory_space<vmem>>, vector<2x128xf32>
    tpu.vector_store %arg3[%c0_21, %c0_22], %25 {strides = array<i32>} : memref<2x128xf32, #tpu.memory_space<vmem>>, vector<2x128xf32>,
    return
  }
}

</mosaic_0001>

<llo_original>
// kernel: fwd.1
$region0: #{fwd.1}
  #allocation0 [shape = 'u32[]', space=smem, size = 0x4, offset = 0x4, fixed_abs, tag = 'smem constant byte address 0x4 - core index']
  #allocation1 [shape = 'u32[144,128]{1,0:T(1,128)}', space=vmem, size = 0x12000, scoped, tag = 'internal scratch']
  %s0 = inlined_call_operand.vmem [shape: f32[2,64], index: 0, kind: input, shape index: {}]
  %s1 = inlined_call_operand.hbm [shape: f32[3,256,256], index: 1, kind: input, shape index: {}]
  %s2 = inlined_call_operand.vmem [shape: f32[3,1,256], index: 2, kind: input, shape index: {}]
  %s3 = inlined_call_operand.vmem [shape: f32[2,128], index: 3, kind: output, shape index: {}]
  %s4 = sld [smem:[#allocation0]]
  $region26: #{fwd.1} parent=0
    _
  %s6 = ssub.s32 1, %s4
  %s7 = scalar_select 0, %s6, %s4
  $region1: #{fwd.1} parent=0
    #allocation2 [shape = 'u8[786432]{0}', space=vmem, size = 0xc0000, scoped, tag = 'input window, operand 1, single buffered']
    #allocation3 [shape = 's32[1]{0}', space=sflag, size = 0x4, scoped, tag = 'scoped memory for fwd.1']
    %8 = vsyncpa [#allocation3], 0
    // Predicated region
    $region2: #{fwd.1} parent=1 // pred_check
      _
    $region3: #{fwd.1} parent=1 // pred_check_branch
      %10 = sbr.rel (0) target = $region5
    $region4: #{fwd.1} parent=1 // pred_region
      _
    $region5: #{fwd.1} parent=1 // pred_fallthru
      _
    // Predicated region
    $region6: #{fwd.1} parent=1 // pred_check
      _
    $region7: #{fwd.1} parent=1 // pred_check_branch
      %12 = sbr.rel (0) target = $region9
    $region8: #{fwd.1} parent=1 // pred_region
      %s14 = ssub.s32 24576, 24576
      %15 = vsyncadd [#allocation3], %s14
      %s16 = sshll.u32 [#allocation2], 4
      %s17 = int_to_ptr.vmem [resolvable:$true] %s16
      %22 = dma.hbm_to_vmem [thread:$0]  %s1, 24576, %s17, [#allocation3], 256, 256, 16
    $region9: #{fwd.1} parent=1 // pred_fallthru
      _
    // Predicated region
    $region10: #{fwd.1} parent=1 // pred_check
      _
    $region11: #{fwd.1} parent=1 // pred_check_branch
      %24 = sbr.rel (0) target = $region13
    $region12: #{fwd.1} parent=1 // pred_region
      _
    $region13: #{fwd.1} parent=1 // pred_fallthru
      _
    // Predicated region
    $region14: #{fwd.1} parent=1 // pred_check
      _
    $region15: #{fwd.1} parent=1 // pred_check_branch
      %26 = sbr.rel (0) target = $region17
    $region16: #{fwd.1} parent=1 // pred_region
      %27 = dma.done [#allocation3], 24576
    $region17: #{fwd.1} parent=1 // pred_fallthru
      _
    %v28 = vld [vmem:[%s0] sm:$0x3]
    %v29 = vld [vmem:[#allocation2] sm:$0xff]
    %v30 = vld [vmem:[#allocation2 + $0x8] sm:$0xff]
    %v31 = vld [vmem:[#allocation2 + $0x10] sm:$0xff]
    %v32 = vld [vmem:[#allocation2 + $0x18] sm:$0xff]
    %v33 = vld [vmem:[#allocation2 + $0x20] sm:$0xff]
    %v34 = vld [vmem:[#allocation2 + $0x28] sm:$0xff]
    %v35 = vld [vmem:[#allocation2 + $0x30] sm:$0xff]
    %v36 = vld [vmem:[#allocation2 + $0x38] sm:$0xff]
    %v37 = vld [vmem:[#allocation2 + $0x40] sm:$0xff]
    %v38 = vld [vmem:[#allocation2 + $0x48] sm:$0xff]
    %v39 = vld [vmem:[#allocation2 + $0x50] sm:$0xff]
    %v40 = vld [vmem:[#allocation2 + $0x58] sm:$0xff]
    %v41 = vld [vmem:[#allocation2 + $0x60] sm:$0xff]
    %v42 = vld [vmem:[#allocation2 + $0x68] sm:$0xff]
    %v43 = vld [vmem:[#allocation2 + $0x70] sm:$0xff]
    %v44 = vld [vmem:[#allocation2 + $0x78] sm:$0xff]
    %v45 = vld [vmem:[%s2] sm:$0x3]
    %v47 = vlaneseq
    %v48 = vshrl.u32 %v47, 7
    %v49 = vsub.s32 0, %v48
    %v50 = vrot.slane %v45, %v49
    %v51 = vlaneseq
    %v52 = vshrl.u32 %v51, 7
    %v53 = vsub.s32 1, %v52
    %v54 = vrot.slane %v45, %v53
    %vm57 = vcmask 523264
    %v59 = vsel %vm57, %v28, 0
    %61 = vmatprep.subr.mxu0 %v30
    %62 = vmatpush1.msra.mxu0 %v29
    %63 = vmatprep.subr.mxu0 %v32
    %64 = vmatpush1.msra.mxu0 %v31
    %65 = vmatprep.subr.mxu0 %v34
    %66 = vmatpush1.msra.mxu0 %v33
    %67 = vmatprep.subr.mxu0 %v36
    %68 = vmatpush1.msra.mxu0 %v35
    %69 = vmatprep.subr.mxu0 %v38
    %70 = vmatpush1.msra.mxu0 %v37
    %71 = vmatprep.subr.mxu0 %v40
    %72 = vmatpush1.msra.mxu0 %v39
    %73 = vmatprep.subr.mxu0 %v42
    %74 = vmatpush1.msra.mxu0 %v41
    %75 = vmatprep.subr.mxu0 %v44
    %76 = vmatpush1.msra.mxu0 %v43
    %77 = vmatprep.subr.mxu0 0.0
    %78 = vmatpush1.msra.mxu0 0.0
    %79 = vmatprep.subr.mxu0 0.0
    %80 = vmatpush1.msra.mxu0 0.0
    %81 = vmatprep.subr.mxu0 0.0
    %82 = vmatpush1.msra.mxu0 0.0
    %83 = vmatprep.subr.mxu0 0.0
    %84 = vmatpush1.msra.mxu0 0.0
    %85 = vmatprep.subr.mxu0 0.0
    %86 = vmatpush1.msra.mxu0 0.0
    %87 = vmatprep.subr.mxu0 0.0
    %88 = vmatpush1.msra.mxu0 0.0
    %89 = vmatprep.subr.mxu0 0.0
    %90 = vmatpush1.msra.mxu0 0.0
    %91 = vmatprep.subr.mxu0 0.0
    %92 = vmatpush1.msra.mxu0 0.0
    %93 = vmatprep.subr.mxu0 0.0
    %94 = vmatpush1.msra.mxu0 0.0
    %95 = vmatprep.subr.mxu0 0.0
    %96 = vmatpush1.msra.mxu0 0.0
    %97 = vmatprep.subr.mxu0 0.0
    %98 = vmatpush1.msra.mxu0 0.0
    %99 = vmatprep.subr.mxu0 0.0
    %100 = vmatpush1.msra.mxu0 0.0
    %101 = vmatprep.subr.mxu0 0.0
    %102 = vmatpush1.msra.mxu0 0.0
    %103 = vmatprep.subr.mxu0 0.0
    %104 = vmatpush1.msra.mxu0 0.0
    %105 = vmatprep.subr.mxu0 0.0
    %106 = vmatpush1.msra.mxu0 0.0
    %107 = vmatprep.subr.mxu0 0.0
    %108 = vmatpush1.msra.mxu0 0.0
    %109 = vmatprep.subr.mxu0 0.0
    %110 = vmatpush1.msra.mxu0 0.0
    %111 = vmatprep.subr.mxu0 0.0
    %112 = vmatpush1.msra.mxu0 0.0
    %113 = vmatprep.subr.mxu0 0.0
    %114 = vmatpush1.msra.mxu0 0.0
    %115 = vmatprep.subr.mxu0 0.0
    %116 = vmatpush1.msra.mxu0 0.0
    %117 = vmatprep.subr.mxu0 0.0
    %118 = vmatpush1.msra.mxu0 0.0
    %119 = vmatprep.subr.mxu0 0.0
    %120 = vmatpush1.msra.mxu0 0.0
    %121 = vmatprep.subr.mxu0 0.0
    %122 = vmatpush1.msra.mxu0 0.0
    %123 = vmatprep.subr.mxu0 0.0
    %124 = vmatpush1.msra.mxu0 0.0
    %125 = vmatprep.mubr.f32.mxu0 0.0
    %126 = vmatmul.mubr.f32.gmra.mrb[0].mxu0 %v59
    %v127 = vpop.f32.mrb[0].mxu0
    %v128 = vadd.f32 %v50, %v127
    %v129 = vpop.f32.mrb[0].mxu0
    %v130 = vadd.f32 %v54, %v129
    %131 = vdwg.mxu0
    %v132 = vmax.f32 %v128, 0.0
    %v133 = vmax.f32 %v130, 0.0
    %s134 = scalar_lea.vmem [#allocation2], 512
    %v135 = vld [vmem:[%s134] sm:$0xff]
    %v136 = vld [vmem:[%s134 + $0x8] sm:$0xff]
    %v137 = vld [vmem:[%s134 + $0x10] sm:$0xff]
    %v138 = vld [vmem:[%s134 + $0x18] sm:$0xff]
    %v139 = vld [vmem:[%s134 + $0x20] sm:$0xff]
    %v140 = vld [vmem:[%s134 + $0x28] sm:$0xff]
    %v141 = vld [vmem:[%s134 + $0x30] sm:$0xff]
    %v142 = vld [vmem:[%s134 + $0x38] sm:$0xff]
    %v143 = vld [vmem:[%s134 + $0x40] sm:$0xff]
    %v144 = vld [vmem:[%s134 + $0x48] sm:$0xff]
    %v145 = vld [vmem:[%s134 + $0x50] sm:$0xff]
    %v146 = vld [vmem:[%s134 + $0x58] sm:$0xff]
    %v147 = vld [vmem:[%s134 + $0x60] sm:$0xff]
    %v148 = vld [vmem:[%s134 + $0x68] sm:$0xff]
    %v149 = vld [vmem:[%s134 + $0x70] sm:$0xff]
    %v150 = vld [vmem:[%s134 + $0x78] sm:$0xff]
    %v151 = vld [vmem:[%s134 + $0x80] sm:$0xff]
    %v152 = vld [vmem:[%s134 + $0x88] sm:$0xff]
    %v153 = vld [vmem:[%s134 + $0x90] sm:$0xff]
    %v154 = vld [vmem:[%s134 + $0x98] sm:$0xff]
    %v155 = vld [vmem:[%s134 + $0xa0] sm:$0xff]
    %v156 = vld [vmem:[%s134 + $0xa8] sm:$0xff]
    %v157 = vld [vmem:[%s134 + $0xb0] sm:$0xff]
    %v158 = vld [vmem:[%s134 + $0xb8] sm:$0xff]
    %v159 = vld [vmem:[%s134 + $0xc0] sm:$0xff]
    %v160 = vld [vmem:[%s134 + $0xc8] sm:$0xff]
    %v161 = vld [vmem:[%s134 + $0xd0] sm:$0xff]
    %v162 = vld [vmem:[%s134 + $0xd8] sm:$0xff]
    %v163 = vld [vmem:[%s134 + $0xe0] sm:$0xff]
    %v164 = vld [vmem:[%s134 + $0xe8] sm:$0xff]
    %v165 = vld [vmem:[%s134 + $0xf0] sm:$0xff]
    %v166 = vld [vmem:[%s134 + $0xf8] sm:$0xff]
    %v167 = vld [vmem:[%s134 + $0x100] sm:$0xff]
    %v168 = vld [vmem:[%s134 + $0x108] sm:$0xff]
    %v169 = vld [vmem:[%s134 + $0x110] sm:$0xff]
    %v170 = vld [vmem:[%s134 + $0x118] sm:$0xff]
    %v171 = vld [vmem:[%s134 + $0x120] sm:$0xff]
    %v172 = vld [vmem:[%s134 + $0x128] sm:$0xff]
    %v173 = vld [vmem:[%s134 + $0x130] sm:$0xff]
    %v174 = vld [vmem:[%s134 + $0x138] sm:$0xff]
    %v175 = vld [vmem:[%s134 + $0x140] sm:$0xff]
    %v176 = vld [vmem:[%s134 + $0x148] sm:$0xff]
    %v177 = vld [vmem:[%s134 + $0x150] sm:$0xff]
    %v178 = vld [vmem:[%s134 + $0x158] sm:$0xff]
    %v179 = vld [vmem:[%s134 + $0x160] sm:$0xff]
    %v180 = vld [vmem:[%s134 + $0x168] sm:$0xff]
    %v181 = vld [vmem:[%s134 + $0x170] sm:$0xff]
    %v182 = vld [vmem:[%s134 + $0x178] sm:$0xff]
    %v183 = vld [vmem:[%s134 + $0x180] sm:$0xff]
    %v184 = vld [vmem:[%s134 + $0x188] sm:$0xff]
    %v185 = vld [vmem:[%s134 + $0x190] sm:$0xff]
    %v186 = vld [vmem:[%s134 + $0x198] sm:$0xff]
    %v187 = vld [vmem:[%s134 + $0x1a0] sm:$0xff]
    %v188 = vld [vmem:[%s134 + $0x1a8] sm:$0xff]
    %v189 = vld [vmem:[%s134 + $0x1b0] sm:$0xff]
    %v190 = vld [vmem:[%s134 + $0x1b8] sm:$0xff]
    %v191 = vld [vmem:[%s134 + $0x1c0] sm:$0xff]
    %v192 = vld [vmem:[%s134 + $0x1c8] sm:$0xff]
    %v193 = vld [vmem:[%s134 + $0x1d0] sm:$0xff]
    %v194 = vld [vmem:[%s134 + $0x1d8] sm:$0xff]
    %v195 = vld [vmem:[%s134 + $0x1e0] sm:$0xff]
    %v196 = vld [vmem:[%s134 + $0x1e8] sm:$0xff]
    %v197 = vld [vmem:[%s134 + $0x1f0] sm:$0xff]
    %v198 = vld [vmem:[%s134 + $0x1f8] sm:$0xff]
    %s199 = scalar_lea.vmem %s2, 2
    %v200 = vld [vmem:[%s199] sm:$0x3]
    %v202 = vlaneseq
    %v203 = vshrl.u32 %v202, 7
    %v204 = vsub.s32 0, %v203
    %v205 = vrot.slane %v200, %v204
    %v206 = vlaneseq
    %v207 = vshrl.u32 %v206, 7
    %v208 = vsub.s32 1, %v207
    %v209 = vrot.slane %v200, %v208
    %212 = vmatprep.subr.mxu0 %v136
    %213 = vmatpush1.msra.mxu0 %v135
    %214 = vmatprep.subr.mxu0 %v138
    %215 = vmatpush1.msra.mxu0 %v137
    %216 = vmatprep.subr.mxu0 %v140
    %217 = vmatpush1.msra.mxu0 %v139
    %218 = vmatprep.subr.mxu0 %v142
    %219 = vmatpush1.msra.mxu0 %v141
    %220 = vmatprep.subr.mxu0 %v144
    %221 = vmatpush1.msra.mxu0 %v143
    %222 = vmatprep.subr.mxu0 %v146
    %223 = vmatpush1.msra.mxu0 %v145
    %224 = vmatprep.subr.mxu0 %v148
    %225 = vmatpush1.msra.mxu0 %v147
    %226 = vmatprep.subr.mxu0 %v150
    %227 = vmatpush1.msra.mxu0 %v149
    %228 = vmatprep.subr.mxu0 %v152
    %229 = vmatpush1.msra.mxu0 %v151
    %230 = vmatprep.subr.mxu0 %v154
    %231 = vmatpush1.msra.mxu0 %v153
    %232 = vmatprep.subr.mxu0 %v156
    %233 = vmatpush1.msra.mxu0 %v155
    %234 = vmatprep.subr.mxu0 %v158
    %235 = vmatpush1.msra.mxu0 %v157
    %236 = vmatprep.subr.mxu0 %v160
    %237 = vmatpush1.msra.mxu0 %v159
    %238 = vmatprep.subr.mxu0 %v162
    %239 = vmatpush1.msra.mxu0 %v161
    %240 = vmatprep.subr.mxu0 %v164
    %241 = vmatpush1.msra.mxu0 %v163
    %242 = vmatprep.subr.mxu0 %v166
    %243 = vmatpush1.msra.mxu0 %v165
    %244 = vmatprep.subr.mxu0 %v168
    %245 = vmatpush1.msra.mxu0 %v167
    %246 = vmatprep.subr.mxu0 %v170
    %247 = vmatpush1.msra.mxu0 %v169
    %248 = vmatprep.subr.mxu0 %v172
    %249 = vmatpush1.msra.mxu0 %v171
    %250 = vmatprep.subr.mxu0 %v174
    %251 = vmatpush1.msra.mxu0 %v173
    %252 = vmatprep.subr.mxu0 %v176
    %253 = vmatpush1.msra.mxu0 %v175
    %254 = vmatprep.subr.mxu0 %v178
    %255 = vmatpush1.msra.mxu0 %v177
    %256 = vmatprep.subr.mxu0 %v180
    %257 = vmatpush1.msra.mxu0 %v179
    %258 = vmatprep.subr.mxu0 %v182
    %259 = vmatpush1.msra.mxu0 %v181
    %260 = vmatprep.subr.mxu0 %v184
    %261 = vmatpush1.msra.mxu0 %v183
    %262 = vmatprep.subr.mxu0 %v186
    %263 = vmatpush1.msra.mxu0 %v185
    %264 = vmatprep.subr.mxu0 %v188
    %265 = vmatpush1.msra.mxu0 %v187
    %266 = vmatprep.subr.mxu0 %v190
    %267 = vmatpush1.msra.mxu0 %v189
    %268 = vmatprep.subr.mxu0 %v192
    %269 = vmatpush1.msra.mxu0 %v191
    %270 = vmatprep.subr.mxu0 %v194
    %271 = vmatpush1.msra.mxu0 %v193
    %272 = vmatprep.subr.mxu0 %v196
    %273 = vmatpush1.msra.mxu0 %v195
    %274 = vmatprep.subr.mxu0 %v198
    %275 = vmatpush1.msra.mxu0 %v197
    %276 = vmatprep.mubr.f32.mxu0 %v133
    %277 = vmatmul.mubr.f32.gmra.mrb[0].mxu0 %v132
    %v278 = vpop.f32.mrb[0].mxu0
    %v279 = vadd.f32 %v205, %v278
    %v280 = vpop.f32.mrb[0].mxu0
    %v281 = vadd.f32 %v209, %v280
    %282 = vdwg.mxu0
    %v283 = vmax.f32 %v279, 0.0
    %v284 = vmax.f32 %v281, 0.0
    %s285 = scalar_lea.vmem [#allocation2], 1024
    %v286 = vld [vmem:[%s285] sm:$0xff]
    %v287 = vld [vmem:[%s285 + $0x10] sm:$0xff]
    %v288 = vld [vmem:[%s285 + $0x20] sm:$0xff]
    %v289 = vld [vmem:[%s285 + $0x30] sm:$0xff]
    %v290 = vld [vmem:[%s285 + $0x40] sm:$0xff]
    %v291 = vld [vmem:[%s285 + $0x50] sm:$0xff]
    %v292 = vld [vmem:[%s285 + $0x60] sm:$0xff]
    %v293 = vld [vmem:[%s285 + $0x70] sm:$0xff]
    %v294 = vld [vmem:[%s285 + $0x80] sm:$0xff]
    %v295 = vld [vmem:[%s285 + $0x90] sm:$0xff]
    %v296 = vld [vmem:[%s285 + $0xa0] sm:$0xff]
    %v297 = vld [vmem:[%s285 + $0xb0] sm:$0xff]
    %v298 = vld [vmem:[%s285 + $0xc0] sm:$0xff]
    %v299 = vld [vmem:[%s285 + $0xd0] sm:$0xff]
    %v300 = vld [vmem:[%s285 + $0xe0] sm:$0xff]
    %v301 = vld [vmem:[%s285 + $0xf0] sm:$0xff]
    %v302 = vld [vmem:[%s285 + $0x100] sm:$0xff]
    %v303 = vld [vmem:[%s285 + $0x110] sm:$0xff]
    %v304 = vld [vmem:[%s285 + $0x120] sm:$0xff]
    %v305 = vld [vmem:[%s285 + $0x130] sm:$0xff]
    %v306 = vld [vmem:[%s285 + $0x140] sm:$0xff]
    %v307 = vld [vmem:[%s285 + $0x150] sm:$0xff]
    %v308 = vld [vmem:[%s285 + $0x160] sm:$0xff]
    %v309 = vld [vmem:[%s285 + $0x170] sm:$0xff]
    %v310 = vld [vmem:[%s285 + $0x180] sm:$0xff]
    %v311 = vld [vmem:[%s285 + $0x190] sm:$0xff]
    %v312 = vld [vmem:[%s285 + $0x1a0] sm:$0xff]
    %v313 = vld [vmem:[%s285 + $0x1b0] sm:$0xff]
    %v314 = vld [vmem:[%s285 + $0x1c0] sm:$0xff]
    %v315 = vld [vmem:[%s285 + $0x1d0] sm:$0xff]
    %v316 = vld [vmem:[%s285 + $0x1e0] sm:$0xff]
    %v317 = vld [vmem:[%s285 + $0x1f0] sm:$0xff]
    %s318 = scalar_lea.vmem %s2, 4
    %v319 = vld [vmem:[%s318] sm:$0x1]
    %v321 = vlaneseq
    %v322 = vshrl.u32 %v321, 7
    %v323 = vsub.s32 0, %v322
    %v324 = vrot.slane %v319, %v323
    %326 = vmatprep.subr.mxu0 0.0
    %327 = vmatpush1.msra.mxu0 %v286
    %328 = vmatprep.subr.mxu0 0.0
    %329 = vmatpush1.msra.mxu0 %v287
    %330 = vmatprep.subr.mxu0 0.0
    %331 = vmatpush1.msra.mxu0 %v288
    %332 = vmatprep.subr.mxu0 0.0
    %333 = vmatpush1.msra.mxu0 %v289
    %334 = vmatprep.subr.mxu0 0.0
    %335 = vmatpush1.msra.mxu0 %v290
    %336 = vmatprep.subr.mxu0 0.0
    %337 = vmatpush1.msra.mxu0 %v291
    %338 = vmatprep.subr.mxu0 0.0
    %339 = vmatpush1.msra.mxu0 %v292
    %340 = vmatprep.subr.mxu0 0.0
    %341 = vmatpush1.msra.mxu0 %v293
    %342 = vmatprep.subr.mxu0 0.0
    %343 = vmatpush1.msra.mxu0 %v294
    %344 = vmatprep.subr.mxu0 0.0
    %345 = vmatpush1.msra.mxu0 %v295
    %346 = vmatprep.subr.mxu0 0.0
    %347 = vmatpush1.msra.mxu0 %v296
    %348 = vmatprep.subr.mxu0 0.0
    %349 = vmatpush1.msra.mxu0 %v297
    %350 = vmatprep.subr.mxu0 0.0
    %351 = vmatpush1.msra.mxu0 %v298
    %352 = vmatprep.subr.mxu0 0.0
    %353 = vmatpush1.msra.mxu0 %v299
    %354 = vmatprep.subr.mxu0 0.0
    %355 = vmatpush1.msra.mxu0 %v300
    %356 = vmatprep.subr.mxu0 0.0
    %357 = vmatpush1.msra.mxu0 %v301
    %358 = vmatprep.subr.mxu0 0.0
    %359 = vmatpush1.msra.mxu0 %v302
    %360 = vmatprep.subr.mxu0 0.0
    %361 = vmatpush1.msra.mxu0 %v303
    %362 = vmatprep.subr.mxu0 0.0
    %363 = vmatpush1.msra.mxu0 %v304
    %364 = vmatprep.subr.mxu0 0.0
    %365 = vmatpush1.msra.mxu0 %v305
    %366 = vmatprep.subr.mxu0 0.0
    %367 = vmatpush1.msra.mxu0 %v306
    %368 = vmatprep.subr.mxu0 0.0
    %369 = vmatpush1.msra.mxu0 %v307
    %370 = vmatprep.subr.mxu0 0.0
    %371 = vmatpush1.msra.mxu0 %v308
    %372 = vmatprep.subr.mxu0 0.0
    %373 = vmatpush1.msra.mxu0 %v309
    %374 = vmatprep.subr.mxu0 0.0
    %375 = vmatpush1.msra.mxu0 %v310
    %376 = vmatprep.subr.mxu0 0.0
    %377 = vmatpush1.msra.mxu0 %v311
    %378 = vmatprep.subr.mxu0 0.0
    %379 = vmatpush1.msra.mxu0 %v312
    %380 = vmatprep.subr.mxu0 0.0
    %381 = vmatpush1.msra.mxu0 %v313
    %382 = vmatprep.subr.mxu0 0.0
    %383 = vmatpush1.msra.mxu0 %v314
    %384 = vmatprep.subr.mxu0 0.0
    %385 = vmatpush1.msra.mxu0 %v315
    %386 = vmatprep.subr.mxu0 0.0
    %387 = vmatpush1.msra.mxu0 %v316
    %388 = vmatprep.subr.mxu0 0.0
    %389 = vmatpush1.msra.mxu0 %v317
    %390 = vmatprep.mubr.f32.mxu0 %v284
    %391 = vmatmul.mubr.f32.gmra.mrb[0].mxu0 %v283
    %v392 = vpop.f32.mrb[0].mxu0
    %v393 = vadd.f32 %v324, %v392
    %v394 = vpop.f32.mrb[0].mxu0
    %395 = vdwg.mxu0
    %396 = vst [vmem:[%s3] sm:$0x3] %v393
    // Predicated region
    $region18: #{fwd.1} parent=1 // pred_check
      _
    $region19: #{fwd.1} parent=1 // pred_check_branch
      %398 = sbr.rel (0) target = $region21
    $region20: #{fwd.1} parent=1 // pred_region
      _
    $region21: #{fwd.1} parent=1 // pred_fallthru
      _
    // Predicated region
    $region22: #{fwd.1} parent=1 // pred_check
      _
    $region23: #{fwd.1} parent=1 // pred_check_branch
      %400 = sbr.rel (0) target = $region25
    $region24: #{fwd.1} parent=1 // pred_region
      _
    $region25: #{fwd.1} parent=1 // pred_fallthru
      _
    %401 = vsyncpa [#allocation3], 1

</llo_original>
